<compile_context>
chip_gen: v5e
topology: v5e:2x2
jax: 0.10.0
libtpu: 0.0.40
codegen_flags: <defaults>
</compile_context>

<pallas_src>
import functools
import math

import jax
import jax.numpy as jnp
from jax.experimental import pallas as pl
from jax.experimental.pallas import tpu as pltpu


def _round_up(x, m):
    return ((x + m - 1) // m) * m


# ----------------------------------------------------------------------------
# Kernel 1: one hyper-convolution hop   e_next = A @ e
# Tiled matmul: grid = (N/TM, N/TK), f32 accumulator scratch, bf16 inputs.
# ----------------------------------------------------------------------------
def _spmm_hop_kernel(a_ref, e_ref, out_ref, acc_ref):
    @pl.when(pl.program_id(1) == 0)
    def _init():
        acc_ref[...] = jnp.zeros_like(acc_ref)

    acc_ref[...] += jnp.dot(a_ref[...], e_ref[...],
                            preferred_element_type=jnp.float32)

    @pl.when(pl.program_id(1) == pl.num_programs(1) - 1)
    def _finalize():
        out_ref[...] = acc_ref[...].astype(out_ref.dtype)


def _spmm_hop(adj_bf16, emb_bf16, *, tm, tk):
    n, _ = adj_bf16.shape
    _, d = emb_bf16.shape
    return pl.pallas_call(
        _spmm_hop_kernel,
        out_shape=jax.ShapeDtypeStruct((n, d), jnp.float32),
        grid_spec=pltpu.PrefetchScalarGridSpec(
            num_scalar_prefetch=0,
            grid=(n // tm, n // tk),
            in_specs=[
                pl.BlockSpec((tm, tk), lambda m, k: (m, k)),   # adjacency tile
                pl.BlockSpec((tk, d), lambda m, k: (k, 0)),    # embedding rows
            ],
            out_specs=pl.BlockSpec((tm, d), lambda m, k: (m, 0)),
            scratch_shapes=[pltpu.VMEM((tm, d), jnp.float32)],
        ),
        compiler_params=pltpu.CompilerParams(
            dimension_semantics=("parallel", "arbitrary"),
            vmem_limit_bytes=32 * 1024 * 1024,   # safe on v5e/v6e/v7x
        ),
    )(adj_bf16, emb_bf16)


def hyper_convolution(adjacency, embedding, layers):
    """mean over {E, A E, A^2 E, ...}; each hop is a tiled Pallas matmul."""
    n, d = embedding.shape
    d_pad = _round_up(d, 128)

    # Tile sizes chosen for the smallest VMEM (v7x: 64 MiB phys / 32 MiB scoped).
    tile = 512
    n_pad = _round_up(n, 128)
    if n_pad > tile:
        n_pad = _round_up(n, tile)
        tm = tk = tile
    else:
        tm = tk = n_pad

    adj_p = jnp.zeros((n_pad, n_pad), jnp.float32).at[:n, :n].set(adjacency)
    emb_p = jnp.zeros((n_pad, d_pad), jnp.float32).at[:n, :d].set(embedding)
    adj_bf16 = adj_p.astype(jnp.bfloat16)     # halves HBM bytes of the N x N operand

    acc = emb_p
    e = emb_p
    for _ in range(layers):                   # chained dependency -> one call per hop
        e = _spmm_hop(adj_bf16, e.astype(jnp.bfloat16), tm=tm, tk=tk)
        acc = acc + e
    item_emb_p = acc / float(layers + 1)
    return item_emb_p[:n, :d], item_emb_p     # (unpadded, padded-for-downstream)


# ----------------------------------------------------------------------------
# Kernel 2: session-embedding attention, gridded over batch tiles.
#   hs   = sum(seq_h, 1) / len
#   nh   = tanh(pos_term + seq_h @ W1s)          (pos_term precomputed in wrapper)
#   gate = sigmoid(nh @ G1 + b_g1 + hs @ G2)
#   beta = sum(gate * w2_row, -1) * mask         (VPU mult + lane reduce, no MXU)
#   out  = sum(beta * seq_h, 1)
# ----------------------------------------------------------------------------
def _session_kernel(seq_h_ref, mask_ref, len_ref, posb_ref,
                    w1s_ref, g1w_ref, g1b_ref, g2w_ref, w2row_ref, out_ref):
    tb, l, d = seq_h_ref.shape
    seq_h = seq_h_ref[...].astype(jnp.float32)            # (TB, L, D) activations f32
    mask = mask_ref[...]                                  # (TB, L)

    inv_len = pl.reciprocal(len_ref[...], approx=True)    # (TB, 1) -> EUP slot
    hs = jnp.sum(seq_h, axis=1) * inv_len                 # (TB, D)

    # L % 8 == 0 and D % 128 == 0 -> these reshapes do not cross (8,128) tiles.
    seq2d = seq_h.reshape(tb * l, d)
    seq_term = jnp.dot(seq2d.astype(jnp.bfloat16), w1s_ref[...],
                       preferred_element_type=jnp.float32)            # (TB*L, D)
    nh = jnp.tanh(seq_term.reshape(tb, l, d) + posb_ref[...][None, :, :])

    g1 = jnp.dot(nh.reshape(tb * l, d).astype(jnp.bfloat16), g1w_ref[...],
                 preferred_element_type=jnp.float32).reshape(tb, l, d)
    g2 = jnp.dot(hs.astype(jnp.bfloat16), g2w_ref[...],
                 preferred_element_type=jnp.float32)                   # (TB, D)
    gate = jax.nn.sigmoid(g1 + g1b_ref[...][None, :, :] + g2[:, None, :])

    beta = jnp.sum(gate * w2row_ref[...][None, :, :], axis=-1, keepdims=True)
    beta = beta * mask[..., None]                          # (TB, L, 1)
    out_ref[...] = jnp.sum(beta * seq_h, axis=1)           # (TB, D) lane-dense store


def session_attention(seq_h, mask, session_len, pos_term,
                      w1s, g1w, g1b, g2w, w2row, *, tb):
    b_pad, l_pad, d_pad = seq_h.shape
    return pl.pallas_call(
        _session_kernel,
        out_shape=jax.ShapeDtypeStruct((b_pad, d_pad), jnp.float32),
        grid_spec=pltpu.PrefetchScalarGridSpec(
            num_scalar_prefetch=0,
            grid=(b_pad // tb,),
            in_specs=[
                pl.BlockSpec((tb, l_pad, d_pad), lambda i: (i, 0, 0)),  # seq_h
                pl.BlockSpec((tb, l_pad), lambda i: (i, 0)),            # mask
                pl.BlockSpec((tb, 1), lambda i: (i, 0)),                # session_len
                # weights / precomputed terms stay VMEM-resident (constant maps)
                pl.BlockSpec((l_pad, d_pad), lambda i: (0, 0)),         # pos@W1p + b1
                pl.BlockSpec((d_pad, d_pad), lambda i: (0, 0)),         # W1_seq
                pl.BlockSpec((d_pad, d_pad), lambda i: (0, 0)),         # glu1 W
                pl.BlockSpec((1, d_pad), lambda i: (0, 0)),             # glu1 b
                pl.BlockSpec((d_pad, d_pad), lambda i: (0, 0)),         # glu2 W
                pl.BlockSpec((1, d_pad), lambda i: (0, 0)),             # w_2 row
            ],
            out_specs=pl.BlockSpec((tb, d_pad), lambda i: (i, 0)),
        ),
        compiler_params=pltpu.CompilerParams(
            dimension_semantics=("parallel",),
            vmem_limit_bytes=32 * 1024 * 1024,
        ),
    )(seq_h, mask, session_len, pos_term, w1s, g1w, g1b, g2w, w2row)


# ----------------------------------------------------------------------------
# Parameters: deterministic uniform(-stdv, stdv), stdv = 1/sqrt(D)
# (matches ISHGL.init_parameters; torch Linear weight layout = (out, in)).
# ----------------------------------------------------------------------------
def init_params(key, n_node, d):
    stdv = 1.0 / math.sqrt(d)
    ks = jax.random.split(key, 8)
    u = lambda k, shape: jax.random.uniform(k, shape, jnp.float32, -stdv, stdv)
    return {
        "embedding": u(ks[0], (n_node, d)),        # nn.Embedding(n_node, D)
        "pos_embedding": u(ks[1], (300, d)),       # nn.Embedding(300, D)
        "w1_weight": u(ks[2], (d, 2 * d)),         # nn.Linear(2D, D).weight
        "w1_bias": u(ks[3], (d,)),
        "w_2": u(ks[4], (d, 1)),                   # nn.Parameter(D, 1)
        "glu1_weight": u(ks[5], (d, d)),
        "glu1_bias": u(ks[6], (d,)),
        "glu2_weight": u(ks[7], (d, d)),           # no bias
    }


def ishgl_forward(params, adjacency, session_item, session_len,
                  reversed_sess_item, mask, layers, beta_hparam):
    n_node, d = params["embedding"].shape

    # ---- HyperGraph convolution (Pallas kernel 1, tiled, bf16 MXU) ----------
    item_embedding, item_emb_padded = hyper_convolution(
        adjacency, params["embedding"], layers)
    d_pad = item_emb_padded.shape[1]

    # ---- generate_session_embedding ----------------------------------------
    B, L = reversed_sess_item.shape
    l_pad = _round_up(L, 8)
    tb = 8
    b_pad = _round_up(B, tb)

    # gather of item rows (id 0 = padding row) — glue in XLA for now.
    padded_table = jnp.concatenate(
        [jnp.zeros((1, d_pad), jnp.float32), item_emb_padded], axis=0)
    idx = jnp.zeros((b_pad, l_pad), jnp.int32).at[:B, :L].set(
        reversed_sess_item.astype(jnp.int32))
    seq_h = jnp.take(padded_table, idx, axis=0).astype(jnp.bfloat16)  # (Bp,Lp,Dp)

    # torch Linear: y = x @ W.T + b ; cat order in reference is [pos, seq_h].
    w1 = params["w1_weight"]                       # (D, 2D) = (out, in)
    w1_pos = w1[:, :d]                             # input cols for pos half
    w1_seq = w1[:, d:]                             # input cols for seq half
    pos = params["pos_embedding"][:L]              # (L, D)
    # batch-independent term hoisted out of the kernel (computed once):
    pos_term_small = pos @ w1_pos.T + params["w1_bias"][None, :]       # (L, D)
    pos_term = jnp.zeros((l_pad, d_pad), jnp.float32).at[:L, :d].set(pos_term_small)

    def pad_w(m):   # torch (out, in) -> transposed (in -> out), zero-padded
        return jnp.zeros((d_pad, d_pad), jnp.float32).at[:d, :d].set(m.T)

    w1s = pad_w(w1_seq).astype(jnp.bfloat16)
    g1w = pad_w(params["glu1_weight"]).astype(jnp.bfloat16)
    g2w = pad_w(params["glu2_weight"]).astype(jnp.bfloat16)
    g1b = jnp.zeros((1, d_pad), jnp.float32).at[0, :d].set(params["glu1_bias"])
    w2row = jnp.zeros((1, d_pad), jnp.float32).at[0, :d].set(params["w_2"][:, 0])

    mask_p = jnp.zeros((b_pad, l_pad), jnp.float32).at[:B, :L].set(
        mask.astype(jnp.float32))
    len_guarded = jnp.maximum(session_len.astype(jnp.float32).reshape(B, 1), 1.0)
    len_p = jnp.ones((b_pad, 1), jnp.float32).at[:B, :].set(len_guarded)

    # attention / gating (Pallas kernel 2, gridded over batch tiles)
    sess_p = session_attention(seq_h, mask_p, len_p, pos_term,
                               w1s, g1w, g1b, g2w, w2row, tb=tb)
    session_embedding = sess_p[:B, :d]

    return item_embedding, session_embedding, beta_hparam


if __name__ == "__main__":
    n_node, d, B, L, layers = 32, 16, 4, 8, 2
    beta_hparam = 0.01

    key = jax.random.PRNGKey(0)
    kp, ka, ki, kl = jax.random.split(key, 4)
    params = init_params(kp, n_node, d)

    # Synthetic dense stand-in for the sparse COO hypergraph adjacency.
    adjacency = jax.random.uniform(ka, (n_node, n_node), jnp.float32)
    adjacency = adjacency / jnp.sum(adjacency, axis=1, keepdims=True)

    # Synthetic session batch: item ids in [1, n_node], 0 = padding.
    lens = jax.random.randint(kl, (B,), 1, L + 1)
    items = jax.random.randint(ki, (B, L), 1, n_node + 1)
    pos_idx = jnp.arange(L)[None, :]
    mask = (pos_idx < lens[:, None]).astype(jnp.int32)           # (B, L)
    reversed_sess_item = items * mask                            # (B, L)
    session_item = reversed_sess_item[:, ::-1]                   # shape-only use
    session_len = lens.reshape(B, 1).astype(jnp.float32)

    fwd = jax.jit(ishgl_forward, static_argnums=(6,))
    item_emb, sess_emb, beta_out = fwd(
        params, adjacency, session_item, session_len,
        reversed_sess_item, mask, layers, beta_hparam)

    jax.block_until_ready((item_emb, sess_emb))
    assert item_emb.shape == (n_node, d)
    assert sess_emb.shape == (B, d)
    print("KERNEL_OK")
</pallas_src>

<mosaic_0001>
module attributes {stable_mosaic.version = 11 : i64} {
  func.func @_spmm_hop_kernel(%arg0: i32, %arg1: i32, %arg2: memref<128x128xbf16, #tpu.memory_space<vmem>>, %arg3: memref<128x128xbf16, #tpu.memory_space<vmem>>, %arg4: memref<128x128xf32, #tpu.memory_space<vmem>>, %arg5: memref<128x128xf32, #tpu.memory_space<vmem>>) attributes {dimension_semantics = [#tpu.dimension_semantics<parallel>, #tpu.dimension_semantics<arbitrary>], iteration_bounds = array<i64: 1, 1>, scalar_prefetch = 0 : i64, scratch_operands = 1 : i64, tpu.core_type = #tpu.core_type<tc>, window_params = [{transform_indices = @transform_0, window_bounds = array<i64: 128, 128>}, {transform_indices = @transform_1, window_bounds = array<i64: 128, 128>}, {transform_indices = @transform_2, window_bounds = array<i64: 128, 128>}]} {
    %c0_i32 = arith.constant 0 : i32
    %0 = arith.cmpi eq, %arg1, %c0_i32 : i32
    %1 = arith.extui %0 : i1 to i32
    %c0_i32_0 = arith.constant 0 : i32
    %2 = arith.cmpi ne, %1, %c0_i32_0 : i32
    scf.if %2 {
      %cst_10 = arith.constant 0.000000e+00 : f32
      %12 = vector.broadcast %cst_10 : f32 to vector<128x128xf32>
      %c0_11 = arith.constant 0 : index
      %c0_12 = arith.constant 0 : index
      %13 = vector.load %arg5[%c0_11, %c0_12] : memref<128x128xf32, #tpu.memory_space<vmem>>, vector<128x128xf32>
      tpu.vector_store %arg5[%c0_11, %c0_12], %12 {strides = array<i32>} : memref<128x128xf32, #tpu.memory_space<vmem>>, vector<128x128xf32>,
    } else {
    }
    %c0 = arith.constant 0 : index
    %c0_1 = arith.constant 0 : index
    %3 = vector.load %arg5[%c0, %c0_1] : memref<128x128xf32, #tpu.memory_space<vmem>>, vector<128x128xf32>
    %c0_2 = arith.constant 0 : index
    %c0_3 = arith.constant 0 : index
    %4 = vector.load %arg2[%c0_2, %c0_3] : memref<128x128xbf16, #tpu.memory_space<vmem>>, vector<128x128xbf16>
    %c0_4 = arith.constant 0 : index
    %c0_5 = arith.constant 0 : index
    %5 = vector.load %arg3[%c0_4, %c0_5] : memref<128x128xbf16, #tpu.memory_space<vmem>>, vector<128x128xbf16>
    %cst = arith.constant dense<0.000000e+00> : vector<128x128xf32>
    %6 = tpu.matmul %4, %5, %cst {dimension_numbers = #tpu.dot_dimension_numbers<[1], [0], [0], [1], [0, 0, 1, 1], [], []>} : vector<128x128xbf16>, vector<128x128xbf16>, vector<128x128xf32> -> vector<128x128xf32>
    %7 = arith.addf %3, %6 : vector<128x128xf32>
    %c0_6 = arith.constant 0 : index
    %c0_7 = arith.constant 0 : index
    %8 = vector.load %arg5[%c0_6, %c0_7] : memref<128x128xf32, #tpu.memory_space<vmem>>, vector<128x128xf32>
    tpu.vector_store %arg5[%c0_6, %c0_7], %7 {strides = array<i32>} : memref<128x128xf32, #tpu.memory_space<vmem>>, vector<128x128xf32>,
    %c0_i32_8 = arith.constant 0 : i32
    %9 = arith.cmpi eq, %arg1, %c0_i32_8 : i32
    %10 = arith.extui %9 : i1 to i32
    %c0_i32_9 = arith.constant 0 : i32
    %11 = arith.cmpi ne, %10, %c0_i32_9 : i32
    scf.if %11 {
      %c0_10 = arith.constant 0 : index
      %c0_11 = arith.constant 0 : index
      %12 = vector.load %arg5[%c0_10, %c0_11] : memref<128x128xf32, #tpu.memory_space<vmem>>, vector<128x128xf32>
      %c0_12 = arith.constant 0 : index
      %c0_13 = arith.constant 0 : index
      %13 = vector.load %arg4[%c0_12, %c0_13] : memref<128x128xf32, #tpu.memory_space<vmem>>, vector<128x128xf32>
      tpu.vector_store %arg4[%c0_12, %c0_13], %12 {strides = array<i32>} : memref<128x128xf32, #tpu.memory_space<vmem>>, vector<128x128xf32>,
    } else {
    }
    return
  }
  func.func @transform_0(%arg0: i32, %arg1: i32) -> (i32, i32) {
    %c0_i32 = arith.constant 0 : i32
    return %arg0, %arg1 : i32, i32
  }
  func.func @transform_1(%arg0: i32, %arg1: i32) -> (i32, i32) {
    %c0_i32 = arith.constant 0 : i32
    %c0_i32_0 = arith.constant 0 : i32
    return %arg1, %c0_i32 : i32, i32
  }
  func.func @transform_2(%arg0: i32, %arg1: i32) -> (i32, i32) {
    %c0_i32 = arith.constant 0 : i32
    %c0_i32_0 = arith.constant 0 : i32
    return %arg0, %c0_i32 : i32, i32
  }
}

module attributes {stable_mosaic.version = 11 : i64} {
  func.func @_session_kernel(%arg0: i32, %arg1: memref<8x8x128xbf16, #tpu.memory_space<vmem>>, %arg2: memref<8x8xf32, #tpu.memory_space<vmem>>, %arg3: memref<8x1xf32, #tpu.memory_space<vmem>>, %arg4: memref<8x128xf32, #tpu.memory_space<vmem>>, %arg5: memref<128x128xbf16, #tpu.memory_space<vmem>>, %arg6: memref<128x128xbf16, #tpu.memory_space<vmem>>, %arg7: memref<1x128xf32, #tpu.memory_space<vmem>>, %arg8: memref<128x128xbf16, #tpu.memory_space<vmem>>, %arg9: memref<1x128xf32, #tpu.memory_space<vmem>>, %arg10: memref<8x128xf32, #tpu.memory_space<vmem>>) attributes {dimension_semantics = [#tpu.dimension_semantics<parallel>], iteration_bounds = array<i64: 1>, scalar_prefetch = 0 : i64, scratch_operands = 0 : i64, tpu.core_type = #tpu.core_type<tc>, window_params = [{transform_indices = @transform_0, window_bounds = array<i64: 8, 8, 128>}, {transform_indices = @transform_1, window_bounds = array<i64: 8, 8>}, {transform_indices = @transform_2, window_bounds = array<i64: 8, 1>}, {pipeline_mode = #tpu.pipeline_mode<synchronous>, transform_indices = @transform_3, window_bounds = array<i64: 8, 128>}, {pipeline_mode = #tpu.pipeline_mode<synchronous>, transform_indices = @transform_4, window_bounds = array<i64: 128, 128>}, {pipeline_mode = #tpu.pipeline_mode<synchronous>, transform_indices = @transform_5, window_bounds = array<i64: 128, 128>}, {pipeline_mode = #tpu.pipeline_mode<synchronous>, transform_indices = @transform_6, window_bounds = array<i64: 1, 128>}, {pipeline_mode = #tpu.pipeline_mode<synchronous>, transform_indices = @transform_7, window_bounds = array<i64: 128, 128>}, {pipeline_mode = #tpu.pipeline_mode<synchronous>, transform_indices = @transform_8, window_bounds = array<i64: 1, 128>}, {transform_indices = @transform_9, window_bounds = array<i64: 8, 128>}]} {
    %c0 = arith.constant 0 : index
    %c0_0 = arith.constant 0 : index
    %c0_1 = arith.constant 0 : index
    %0 = vector.load %arg1[%c0, %c0_0, %c0_1] : memref<8x8x128xbf16, #tpu.memory_space<vmem>>, vector<8x8x128xbf16>
    %1 = arith.extf %0 : vector<8x8x128xbf16> to vector<8x8x128xf32>
    %c0_2 = arith.constant 0 : index
    %c0_3 = arith.constant 0 : index
    %2 = vector.load %arg2[%c0_2, %c0_3] : memref<8x8xf32, #tpu.memory_space<vmem>>, vector<8x8xf32>
    %c0_4 = arith.constant 0 : index
    %c0_5 = arith.constant 0 : index
    %3 = vector.load %arg3[%c0_4, %c0_5] : memref<8x1xf32, #tpu.memory_space<vmem>>, vector<8x1xf32>
    %4 = tpu.reciprocal %3 {approx = true} : vector<8x1xf32> -> vector<8x1xf32>
    %cst = arith.constant dense<0.000000e+00> : vector<8x128xf32>
    %5 = vector.multi_reduction <add>, %1, %cst [1] : vector<8x8x128xf32> to vector<8x128xf32>
    %6 = vector.broadcast %4 : vector<8x1xf32> to vector<8x128xf32>
    %7 = arith.mulf %5, %6 : vector<8x128xf32>
    %8 = vector.shape_cast %1 : vector<8x8x128xf32> to vector<64x128xf32>
    %9 = arith.truncf %8 : vector<64x128xf32> to vector<64x128xbf16>
    %c0_6 = arith.constant 0 : index
    %c0_7 = arith.constant 0 : index
    %10 = vector.load %arg5[%c0_6, %c0_7] : memref<128x128xbf16, #tpu.memory_space<vmem>>, vector<128x128xbf16>
    %cst_8 = arith.constant dense<0.000000e+00> : vector<64x128xf32>
    %11 = tpu.matmul %9, %10, %cst_8 {dimension_numbers = #tpu.dot_dimension_numbers<[1], [0], [0], [1], [0, 0, 1, 1], [], []>} : vector<64x128xbf16>, vector<128x128xbf16>, vector<64x128xf32> -> vector<64x128xf32>
    %12 = vector.shape_cast %11 : vector<64x128xf32> to vector<8x8x128xf32>
    %c0_9 = arith.constant 0 : index
    %c0_10 = arith.constant 0 : index
    %13 = vector.load %arg4[%c0_9, %c0_10] : memref<8x128xf32, #tpu.memory_space<vmem>>, vector<8x128xf32>
    %14 = vector.shape_cast %13 : vector<8x128xf32> to vector<1x8x128xf32>
    %15 = vector.broadcast %14 : vector<1x8x128xf32> to vector<8x8x128xf32>
    %16 = arith.addf %12, %15 : vector<8x8x128xf32>
    %17 = math.tanh %16 : vector<8x8x128xf32>
    %18 = vector.shape_cast %17 : vector<8x8x128xf32> to vector<64x128xf32>
    %19 = arith.truncf %18 : vector<64x128xf32> to vector<64x128xbf16>
    %c0_11 = arith.constant 0 : index
    %c0_12 = arith.constant 0 : index
    %20 = vector.load %arg6[%c0_11, %c0_12] : memref<128x128xbf16, #tpu.memory_space<vmem>>, vector<128x128xbf16>
    %cst_13 = arith.constant dense<0.000000e+00> : vector<64x128xf32>
    %21 = tpu.matmul %19, %20, %cst_13 {dimension_numbers = #tpu.dot_dimension_numbers<[1], [0], [0], [1], [0, 0, 1, 1], [], []>} : vector<64x128xbf16>, vector<128x128xbf16>, vector<64x128xf32> -> vector<64x128xf32>
    %22 = vector.shape_cast %21 : vector<64x128xf32> to vector<8x8x128xf32>
    %23 = arith.truncf %7 : vector<8x128xf32> to vector<8x128xbf16>
    %c0_14 = arith.constant 0 : index
    %c0_15 = arith.constant 0 : index
    %24 = vector.load %arg8[%c0_14, %c0_15] : memref<128x128xbf16, #tpu.memory_space<vmem>>, vector<128x128xbf16>
    %cst_16 = arith.constant dense<0.000000e+00> : vector<8x128xf32>
    %25 = tpu.matmul %23, %24, %cst_16 {dimension_numbers = #tpu.dot_dimension_numbers<[1], [0], [0], [1], [0, 0, 1, 1], [], []>} : vector<8x128xbf16>, vector<128x128xbf16>, vector<8x128xf32> -> vector<8x128xf32>
    %c0_17 = arith.constant 0 : index
    %c0_18 = arith.constant 0 : index
    %26 = vector.load %arg7[%c0_17, %c0_18] : memref<1x128xf32, #tpu.memory_space<vmem>>, vector<1x128xf32>
    %27 = vector.shape_cast %26 : vector<1x128xf32> to vector<1x1x128xf32>
    %28 = vector.broadcast %27 : vector<1x1x128xf32> to vector<8x8x128xf32>
    %29 = arith.addf %22, %28 : vector<8x8x128xf32>
    %30 = vector.shape_cast %25 : vector<8x128xf32> to vector<8x1x128xf32>
    %31 = vector.broadcast %30 : vector<8x1x128xf32> to vector<8x8x128xf32>
    %32 = arith.addf %29, %31 : vector<8x8x128xf32>
    %33 = arith.negf %32 : vector<8x8x128xf32>
    %34 = math.exp %33 : vector<8x8x128xf32>
    %cst_19 = arith.constant 1.000000e+00 : f32
    %35 = vector.broadcast %cst_19 : f32 to vector<8x8x128xf32>
    %36 = arith.addf %35, %34 : vector<8x8x128xf32>
    %37 = arith.divf %35, %36 : vector<8x8x128xf32>
    %c0_20 = arith.constant 0 : index
    %c0_21 = arith.constant 0 : index
    %38 = vector.load %arg9[%c0_20, %c0_21] : memref<1x128xf32, #tpu.memory_space<vmem>>, vector<1x128xf32>
    %39 = vector.shape_cast %38 : vector<1x128xf32> to vector<1x1x128xf32>
    %40 = vector.broadcast %39 : vector<1x1x128xf32> to vector<8x8x128xf32>
    %41 = arith.mulf %37, %40 : vector<8x8x128xf32>
    %cst_22 = arith.constant dense<0.000000e+00> : vector<8x8xf32>
    %42 = vector.multi_reduction <add>, %41, %cst_22 [2] : vector<8x8x128xf32> to vector<8x8xf32>
    %43 = vector.shape_cast %42 : vector<8x8xf32> to vector<8x8x1xf32>
    %44 = vector.shape_cast %2 : vector<8x8xf32> to vector<8x8x1xf32>
    %45 = arith.mulf %43, %44 : vector<8x8x1xf32>
    %46 = vector.broadcast %45 : vector<8x8x1xf32> to vector<8x8x128xf32>
    %47 = arith.mulf %46, %1 : vector<8x8x128xf32>
    %cst_23 = arith.constant dense<0.000000e+00> : vector<8x128xf32>
    %48 = vector.multi_reduction <add>, %47, %cst_23 [1] : vector<8x8x128xf32> to vector<8x128xf32>
    %c0_24 = arith.constant 0 : index
    %c0_25 = arith.constant 0 : index
    %49 = vector.load %arg10[%c0_24, %c0_25] : memref<8x128xf32, #tpu.memory_space<vmem>>, vector<8x128xf32>
    tpu.vector_store %arg10[%c0_24, %c0_25], %48 {strides = array<i32>} : memref<8x128xf32, #tpu.memory_space<vmem>>, vector<8x128xf32>,
    return
  }
  func.func @transform_0(%arg0: i32) -> (i32, i32, i32) {
    %c0_i32 = arith.constant 0 : i32
    %c0_i32_0 = arith.constant 0 : i32
    %c0_i32_1 = arith.constant 0 : i32
    return %arg0, %c0_i32, %c0_i32_0 : i32, i32, i32
  }
  func.func @transform_1(%arg0: i32) -> (i32, i32) {
    %c0_i32 = arith.constant 0 : i32
    %c0_i32_0 = arith.constant 0 : i32
    return %arg0, %c0_i32 : i32, i32
  }
  func.func @transform_2(%arg0: i32) -> (i32, i32) {
    %c0_i32 = arith.constant 0 : i32
    %c0_i32_0 = arith.constant 0 : i32
    return %arg0, %c0_i32 : i32, i32
  }
  func.func @transform_3(%arg0: i32) -> (i32, i32) {
    %c0_i32 = arith.constant 0 : i32
    %c0_i32_0 = arith.constant 0 : i32
    %c0_i32_1 = arith.constant 0 : i32
    return %c0_i32, %c0_i32_0 : i32, i32
  }
  func.func @transform_4(%arg0: i32) -> (i32, i32) {
    %c0_i32 = arith.constant 0 : i32
    %c0_i32_0 = arith.constant 0 : i32
    %c0_i32_1 = arith.constant 0 : i32
    return %c0_i32, %c0_i32_0 : i32, i32
  }
  func.func @transform_5(%arg0: i32) -> (i32, i32) {
    %c0_i32 = arith.constant 0 : i32
    %c0_i32_0 = arith.constant 0 : i32
    %c0_i32_1 = arith.constant 0 : i32
    return %c0_i32, %c0_i32_0 : i32, i32
  }
  func.func @transform_6(%arg0: i32) -> (i32, i32) {
    %c0_i32 = arith.constant 0 : i32
    %c0_i32_0 = arith.constant 0 : i32
    %c0_i32_1 = arith.constant 0 : i32
    return %c0_i32, %c0_i32_0 : i32, i32
  }
  func.func @transform_7(%arg0: i32) -> (i32, i32) {
    %c0_i32 = arith.constant 0 : i32
    %c0_i32_0 = arith.constant 0 : i32
    %c0_i32_1 = arith.constant 0 : i32
    return %c0_i32, %c0_i32_0 : i32, i32
  }
  func.func @transform_8(%arg0: i32) -> (i32, i32) {
    %c0_i32 = arith.constant 0 : i32
    %c0_i32_0 = arith.constant 0 : i32
    %c0_i32_1 = arith.constant 0 : i32
    return %c0_i32, %c0_i32_0 : i32, i32
  }
  func.func @transform_9(%arg0: i32) -> (i32, i32) {
    %c0_i32 = arith.constant 0 : i32
    %c0_i32_0 = arith.constant 0 : i32
    return %arg0, %c0_i32 : i32, i32
  }
}

</mosaic_0001>

<llo_original>
// kernel: ishgl_forward.3
$region0: #{ishgl_forward.3}
  #allocation0 [shape = 'u32[]', space=smem, size = 0x4, offset = 0x4, fixed_abs, tag = 'smem constant byte address 0x4 - core index']
  #allocation1 [shape = 'u32[72,128]{1,0:T(1,128)}', space=vmem, size = 0x9000, scoped, tag = 'internal scratch']
  #allocation2 [shape = 'f32[128,128]{1,0:T(8,128)}', space=vmem, size = 0x10000, scoped, tag = 'scratch operand']
  %s0 = inlined_call_operand.vmem [shape: bf16[128,128], index: 0, kind: input, shape index: {}]
  %s1 = inlined_call_operand.vmem [shape: bf16[128,128], index: 1, kind: input, shape index: {}]
  %s2 = inlined_call_operand.vmem [shape: f32[128,128], index: 2, kind: output, shape index: {}]
  %s3 = sld [smem:[#allocation0]]
  $region26: #{ishgl_forward.3} parent=0
    _
  %s5 = ssub.s32 1, %s3
  %s6 = scalar_select 0, %s5, %s3
  // Predicated region
  $region2: #{ishgl_forward.3} parent=0 // pred_check
    _
  $region3: #{ishgl_forward.3} parent=0 // pred_check_branch
    %8 = sbr.rel (0) target = $region5
  $region4: #{ishgl_forward.3} parent=0 // pred_region
    _
  $region5: #{ishgl_forward.3} parent=0 // pred_fallthru
    _
  // Predicated region
  $region6: #{ishgl_forward.3} parent=0 // pred_check
    _
  $region7: #{ishgl_forward.3} parent=0 // pred_check_branch
    %10 = sbr.rel (0) target = $region9
  $region8: #{ishgl_forward.3} parent=0 // pred_region
    _
  $region9: #{ishgl_forward.3} parent=0 // pred_fallthru
    _
  %p11 = scmp.eq.s32.totalorder 0, 0
  // Predicated region
  $region10: #{ishgl_forward.3} parent=0 // pred_check
    %p12 = pneg %p11
  $region11: #{ishgl_forward.3} parent=0 // pred_check_branch
    %14 = sbr.rel (%p12) target = $region13
  $region12: #{ishgl_forward.3} parent=0 // pred_region
    %15 = vst [vmem:[#allocation2] sm:$0xff] 0.0
    %16 = vst [vmem:[#allocation2 + $0x8] sm:$0xff] 0.0
    %17 = vst [vmem:[#allocation2 + $0x10] sm:$0xff] 0.0
    %18 = vst [vmem:[#allocation2 + $0x18] sm:$0xff] 0.0
    %19 = vst [vmem:[#allocation2 + $0x20] sm:$0xff] 0.0
    %20 = vst [vmem:[#allocation2 + $0x28] sm:$0xff] 0.0
    %21 = vst [vmem:[#allocation2 + $0x30] sm:$0xff] 0.0
    %22 = vst [vmem:[#allocation2 + $0x38] sm:$0xff] 0.0
    %23 = vst [vmem:[#allocation2 + $0x40] sm:$0xff] 0.0
    %24 = vst [vmem:[#allocation2 + $0x48] sm:$0xff] 0.0
    %25 = vst [vmem:[#allocation2 + $0x50] sm:$0xff] 0.0
    %26 = vst [vmem:[#allocation2 + $0x58] sm:$0xff] 0.0
    %27 = vst [vmem:[#allocation2 + $0x60] sm:$0xff] 0.0
    %28 = vst [vmem:[#allocation2 + $0x68] sm:$0xff] 0.0
    %29 = vst [vmem:[#allocation2 + $0x70] sm:$0xff] 0.0
    %30 = vst [vmem:[#allocation2 + $0x78] sm:$0xff] 0.0
  $region13: #{ishgl_forward.3} parent=0 // pred_fallthru
    _
  %v31 = vld [vmem:[#allocation2] sm:$0xff]
  %v32 = vld [vmem:[#allocation2 + $0x8] sm:$0xff]
  %v33 = vld [vmem:[#allocation2 + $0x10] sm:$0xff]
  %v34 = vld [vmem:[#allocation2 + $0x18] sm:$0xff]
  %v35 = vld [vmem:[#allocation2 + $0x20] sm:$0xff]
  %v36 = vld [vmem:[#allocation2 + $0x28] sm:$0xff]
  %v37 = vld [vmem:[#allocation2 + $0x30] sm:$0xff]
  %v38 = vld [vmem:[#allocation2 + $0x38] sm:$0xff]
  %v39 = vld [vmem:[#allocation2 + $0x40] sm:$0xff]
  %v40 = vld [vmem:[#allocation2 + $0x48] sm:$0xff]
  %v41 = vld [vmem:[#allocation2 + $0x50] sm:$0xff]
  %v42 = vld [vmem:[#allocation2 + $0x58] sm:$0xff]
  %v43 = vld [vmem:[#allocation2 + $0x60] sm:$0xff]
  %v44 = vld [vmem:[#allocation2 + $0x68] sm:$0xff]
  %v45 = vld [vmem:[#allocation2 + $0x70] sm:$0xff]
  %v46 = vld [vmem:[#allocation2 + $0x78] sm:$0xff]
  %v47 = vld [vmem:[%s0] sm:$0xf]
  %v48 = vld [vmem:[%s0 + $0x4] sm:$0xf]
  %v49 = vld [vmem:[%s0 + $0x8] sm:$0xf]
  %v50 = vld [vmem:[%s0 + $0xc] sm:$0xf]
  %v51 = vld [vmem:[%s0 + $0x10] sm:$0xf]
  %v52 = vld [vmem:[%s0 + $0x14] sm:$0xf]
  %v53 = vld [vmem:[%s0 + $0x18] sm:$0xf]
  %v54 = vld [vmem:[%s0 + $0x1c] sm:$0xf]
  %v55 = vld [vmem:[%s0 + $0x20] sm:$0xf]
  %v56 = vld [vmem:[%s0 + $0x24] sm:$0xf]
  %v57 = vld [vmem:[%s0 + $0x28] sm:$0xf]
  %v58 = vld [vmem:[%s0 + $0x2c] sm:$0xf]
  %v59 = vld [vmem:[%s0 + $0x30] sm:$0xf]
  %v60 = vld [vmem:[%s0 + $0x34] sm:$0xf]
  %v61 = vld [vmem:[%s0 + $0x38] sm:$0xf]
  %v62 = vld [vmem:[%s0 + $0x3c] sm:$0xf]
  %v63 = vld [vmem:[%s1] sm:$0xf]
  %v64 = vld [vmem:[%s1 + $0x4] sm:$0xf]
  %v65 = vld [vmem:[%s1 + $0x8] sm:$0xf]
  %v66 = vld [vmem:[%s1 + $0xc] sm:$0xf]
  %v67 = vld [vmem:[%s1 + $0x10] sm:$0xf]
  %v68 = vld [vmem:[%s1 + $0x14] sm:$0xf]
  %v69 = vld [vmem:[%s1 + $0x18] sm:$0xf]
  %v70 = vld [vmem:[%s1 + $0x1c] sm:$0xf]
  %v71 = vld [vmem:[%s1 + $0x20] sm:$0xf]
  %v72 = vld [vmem:[%s1 + $0x24] sm:$0xf]
  %v73 = vld [vmem:[%s1 + $0x28] sm:$0xf]
  %v74 = vld [vmem:[%s1 + $0x2c] sm:$0xf]
  %v75 = vld [vmem:[%s1 + $0x30] sm:$0xf]
  %v76 = vld [vmem:[%s1 + $0x34] sm:$0xf]
  %v77 = vld [vmem:[%s1 + $0x38] sm:$0xf]
  %v78 = vld [vmem:[%s1 + $0x3c] sm:$0xf]
  %v95 = vunpack.c.l.b16 %v47
  %v96 = vunpack.c.l.b16 %v48
  %v97 = vunpack.c.l.b16 %v49
  %v98 = vunpack.c.l.b16 %v50
  %v99 = vunpack.c.l.b16 %v51
  %v100 = vunpack.c.l.b16 %v52
  %v101 = vunpack.c.l.b16 %v53
  %v102 = vunpack.c.l.b16 %v54
  %v103 = vunpack.c.l.b16 %v55
  %v104 = vunpack.c.l.b16 %v56
  %v105 = vunpack.c.l.b16 %v57
  %v106 = vunpack.c.l.b16 %v58
  %v107 = vunpack.c.l.b16 %v59
  %v108 = vunpack.c.l.b16 %v60
  %v109 = vunpack.c.l.b16 %v61
  %v110 = vunpack.c.l.b16 %v62
  %v111 = vpack.c.b16 %v96, %v95
  %v112 = vpack.c.b16 %v98, %v97
  %v113 = vpack.c.b16 %v100, %v99
  %v114 = vpack.c.b16 %v102, %v101
  %v115 = vpack.c.b16 %v104, %v103
  %v116 = vpack.c.b16 %v106, %v105
  %v117 = vpack.c.b16 %v108, %v107
  %v118 = vpack.c.b16 %v110, %v109
  %v143 = vunpack.c.l.b16 %v63
  %v144 = vunpack.c.l.b16 %v64
  %v145 = vunpack.c.l.b16 %v65
  %v146 = vunpack.c.l.b16 %v66
  %v147 = vunpack.c.l.b16 %v67
  %v148 = vunpack.c.l.b16 %v68
  %v149 = vunpack.c.l.b16 %v69
  %v150 = vunpack.c.l.b16 %v70
  %v151 = vunpack.c.l.b16 %v71
  %v152 = vunpack.c.l.b16 %v72
  %v153 = vunpack.c.l.b16 %v73
  %v154 = vunpack.c.l.b16 %v74
  %v155 = vunpack.c.l.b16 %v75
  %v156 = vunpack.c.l.b16 %v76
  %v157 = vunpack.c.l.b16 %v77
  %v158 = vunpack.c.l.b16 %v78
  %v159 = vpack.c.b16 %v144, %v143
  %v160 = vpack.c.b16 %v146, %v145
  %v161 = vpack.c.b16 %v148, %v147
  %v162 = vpack.c.b16 %v150, %v149
  %v163 = vpack.c.b16 %v152, %v151
  %v164 = vpack.c.b16 %v154, %v153
  %v165 = vpack.c.b16 %v156, %v155
  %v166 = vpack.c.b16 %v158, %v157
  %175 = vmatpush.bf16.msra.mxu0 %v166
  %176 = vmatpush.bf16.msra.mxu0 %v165
  %177 = vmatpush.bf16.msra.mxu0 %v164
  %178 = vmatpush.bf16.msra.mxu0 %v163
  %179 = vmatpush.bf16.msra.mxu0 %v162
  %180 = vmatpush.bf16.msra.mxu0 %v161
  %181 = vmatpush.bf16.msra.mxu0 %v160
  %182 = vmatpush.bf16.msra.mxu0 %v159
  %183 = vmatmul.bf16.gmra.mxu0 %v111
  %v184 = vpop.f32.mrf.mxu0
  %v185 = vadd.f32 0.0, %v184
  %v186 = vpop.f32.mrf.mxu0
  %v187 = vadd.f32 0.0, %v186
  %188 = vmatmul.bf16.gmra.mxu0 %v112
  %v189 = vpop.f32.mrf.mxu0
  %v190 = vadd.f32 0.0, %v189
  %v191 = vpop.f32.mrf.mxu0
  %v192 = vadd.f32 0.0, %v191
  %193 = vmatmul.bf16.gmra.mxu0 %v113
  %v194 = vpop.f32.mrf.mxu0
  %v195 = vadd.f32 0.0, %v194
  %v196 = vpop.f32.mrf.mxu0
  %v197 = vadd.f32 0.0, %v196
  %198 = vmatmul.bf16.gmra.mxu0 %v114
  %v199 = vpop.f32.mrf.mxu0
  %v200 = vadd.f32 0.0, %v199
  %v201 = vpop.f32.mrf.mxu0
  %v202 = vadd.f32 0.0, %v201
  %203 = vmatmul.bf16.gmra.mxu0 %v115
  %v204 = vpop.f32.mrf.mxu0
  %v205 = vadd.f32 0.0, %v204
  %v206 = vpop.f32.mrf.mxu0
  %v207 = vadd.f32 0.0, %v206
  %208 = vmatmul.bf16.gmra.mxu0 %v116
  %v209 = vpop.f32.mrf.mxu0
  %v210 = vadd.f32 0.0, %v209
  %v211 = vpop.f32.mrf.mxu0
  %v212 = vadd.f32 0.0, %v211
  %213 = vmatmul.bf16.gmra.mxu0 %v117
  %v214 = vpop.f32.mrf.mxu0
  %v215 = vadd.f32 0.0, %v214
  %v216 = vpop.f32.mrf.mxu0
  %v217 = vadd.f32 0.0, %v216
  %218 = vmatmul.bf16.gmra.mxu0 %v118
  %v219 = vpop.f32.mrf.mxu0
  %v220 = vadd.f32 0.0, %v219
  %v221 = vpop.f32.mrf.mxu0
  %v222 = vadd.f32 0.0, %v221
  %223 = vdwg.mxu0
  %v224 = vadd.f32 %v31, %v185
  %v225 = vadd.f32 %v32, %v187
  %v226 = vadd.f32 %v33, %v190
  %v227 = vadd.f32 %v34, %v192
  %v228 = vadd.f32 %v35, %v195
  %v229 = vadd.f32 %v36, %v197
  %v230 = vadd.f32 %v37, %v200
  %v231 = vadd.f32 %v38, %v202
  %v232 = vadd.f32 %v39, %v205
  %v233 = vadd.f32 %v40, %v207
  %v234 = vadd.f32 %v41, %v210
  %v235 = vadd.f32 %v42, %v212
  %v236 = vadd.f32 %v43, %v215
  %v237 = vadd.f32 %v44, %v217
  %v238 = vadd.f32 %v45, %v220
  %v239 = vadd.f32 %v46, %v222
  %240 = vst [vmem:[#allocation2] sm:$0xff] %v224
  %241 = vst [vmem:[#allocation2 + $0x8] sm:$0xff] %v225
  %242 = vst [vmem:[#allocation2 + $0x10] sm:$0xff] %v226
  %243 = vst [vmem:[#allocation2 + $0x18] sm:$0xff] %v227
  %244 = vst [vmem:[#allocation2 + $0x20] sm:$0xff] %v228
  %245 = vst [vmem:[#allocation2 + $0x28] sm:$0xff] %v229
  %246 = vst [vmem:[#allocation2 + $0x30] sm:$0xff] %v230
  %247 = vst [vmem:[#allocation2 + $0x38] sm:$0xff] %v231
  %248 = vst [vmem:[#allocation2 + $0x40] sm:$0xff] %v232
  %249 = vst [vmem:[#allocation2 + $0x48] sm:$0xff] %v233
  %250 = vst [vmem:[#allocation2 + $0x50] sm:$0xff] %v234
  %251 = vst [vmem:[#allocation2 + $0x58] sm:$0xff] %v235
  %252 = vst [vmem:[#allocation2 + $0x60] sm:$0xff] %v236
  %253 = vst [vmem:[#allocation2 + $0x68] sm:$0xff] %v237
  %254 = vst [vmem:[#allocation2 + $0x70] sm:$0xff] %v238
  %255 = vst [vmem:[#allocation2 + $0x78] sm:$0xff] %v239
  // Predicated region
  $region14: #{ishgl_forward.3} parent=0 // pred_check
    %p256 = pneg %p11
  $region15: #{ishgl_forward.3} parent=0 // pred_check_branch
    %258 = sbr.rel (%p256) target = $region17
  $region16: #{ishgl_forward.3} parent=0 // pred_region
    %v259 = vld [vmem:[#allocation2] sm:$0xff]
    %v260 = vld [vmem:[#allocation2 + $0x8] sm:$0xff]
    %v261 = vld [vmem:[#allocation2 + $0x10] sm:$0xff]
    %v262 = vld [vmem:[#allocation2 + $0x18] sm:$0xff]
    %v263 = vld [vmem:[#allocation2 + $0x20] sm:$0xff]
    %v264 = vld [vmem:[#allocation2 + $0x28] sm:$0xff]
    %v265 = vld [vmem:[#allocation2 + $0x30] sm:$0xff]
    %v266 = vld [vmem:[#allocation2 + $0x38] sm:$0xff]
    %v267 = vld [vmem:[#allocation2 + $0x40] sm:$0xff]
    %v268 = vld [vmem:[#allocation2 + $0x48] sm:$0xff]
    %v269 = vld [vmem:[#allocation2 + $0x50] sm:$0xff]
    %v270 = vld [vmem:[#allocation2 + $0x58] sm:$0xff]
    %v271 = vld [vmem:[#allocation2 + $0x60] sm:$0xff]
    %v272 = vld [vmem:[#allocation2 + $0x68] sm:$0xff]
    %v273 = vld [vmem:[#allocation2 + $0x70] sm:$0xff]
    %v274 = vld [vmem:[#allocation2 + $0x78] sm:$0xff]
    %275 = vst [vmem:[%s2] sm:$0xff] %v259
    %276 = vst [vmem:[%s2 + $0x8] sm:$0xff] %v260
    %277 = vst [vmem:[%s2 + $0x10] sm:$0xff] %v261
    %278 = vst [vmem:[%s2 + $0x18] sm:$0xff] %v262
    %279 = vst [vmem:[%s2 + $0x20] sm:$0xff] %v263
    %280 = vst [vmem:[%s2 + $0x28] sm:$0xff] %v264
    %281 = vst [vmem:[%s2 + $0x30] sm:$0xff] %v265
    %282 = vst [vmem:[%s2 + $0x38] sm:$0xff] %v266
    %283 = vst [vmem:[%s2 + $0x40] sm:$0xff] %v267
    %284 = vst [vmem:[%s2 + $0x48] sm:$0xff] %v268
    %285 = vst [vmem:[%s2 + $0x50] sm:$0xff] %v269
    %286 = vst [vmem:[%s2 + $0x58] sm:$0xff] %v270
    %287 = vst [vmem:[%s2 + $0x60] sm:$0xff] %v271
    %288 = vst [vmem:[%s2 + $0x68] sm:$0xff] %v272
    %289 = vst [vmem:[%s2 + $0x70] sm:$0xff] %v273
    %290 = vst [vmem:[%s2 + $0x78] sm:$0xff] %v274
  $region17: #{ishgl_forward.3} parent=0 // pred_fallthru
    _
  // Predicated region
  $region18: #{ishgl_forward.3} parent=0 // pred_check
    _
  $region19: #{ishgl_forward.3} parent=0 // pred_check_branch
    %292 = sbr.rel (0) target = $region21
  $region20: #{ishgl_forward.3} parent=0 // pred_region
    _
  $region21: #{ishgl_forward.3} parent=0 // pred_fallthru
    _
  // Predicated region
  $region22: #{ishgl_forward.3} parent=0 // pred_check
    _
  $region23: #{ishgl_forward.3} parent=0 // pred_check_branch
    %294 = sbr.rel (0) target = $region25
  $region24: #{ishgl_forward.3} parent=0 // pred_region
    _
  $region25: #{ishgl_forward.3} parent=0 // pred_fallthru
    _

// kernel: ishgl_forward.5
$region0: #{ishgl_forward.5}
  #allocation0 [shape = 'u32[]', space=smem, size = 0x4, offset = 0x4, fixed_abs, tag = 'smem constant byte address 0x4 - core index']
  #allocation1 [shape = 'u32[72,128]{1,0:T(1,128)}', space=vmem, size = 0x9000, scoped, tag = 'internal scratch']
  %s0 = inlined_call_operand.vmem [shape: bf16[8,8,128], index: 0, kind: input, shape index: {}]
  %s1 = inlined_call_operand.vmem [shape: f32[8,8], index: 1, kind: input, shape index: {}]
  %s2 = inlined_call_operand.vmem [shape: f32[8,1], index: 2, kind: input, shape index: {}]
  %s3 = inlined_call_operand.vmem [shape: f32[8,128], index: 3, kind: input, shape index: {}]
  %s4 = inlined_call_operand.vmem [shape: bf16[128,128], index: 4, kind: input, shape index: {}]
  %s5 = inlined_call_operand.vmem [shape: bf16[128,128], index: 5, kind: input, shape index: {}]
  %s6 = inlined_call_operand.vmem [shape: f32[1,128], index: 6, kind: input, shape index: {}]
  %s7 = inlined_call_operand.vmem [shape: bf16[128,128], index: 7, kind: input, shape index: {}]
  %s8 = inlined_call_operand.vmem [shape: f32[1,128], index: 8, kind: input, shape index: {}]
  %s9 = inlined_call_operand.vmem [shape: f32[8,128], index: 9, kind: output, shape index: {}]
  %s10 = sld [smem:[#allocation0]]
  $region46: #{ishgl_forward.5} parent=0
    _
  %s12 = ssub.s32 1, %s10
  %s13 = scalar_select 0, %s12, %s10
  // Predicated region
  $region2: #{ishgl_forward.5} parent=0 // pred_check
    _
  $region3: #{ishgl_forward.5} parent=0 // pred_check_branch
    %15 = sbr.rel (0) target = $region5
  $region4: #{ishgl_forward.5} parent=0 // pred_region
    _
  $region5: #{ishgl_forward.5} parent=0 // pred_fallthru
    _
  // Predicated region
  $region6: #{ishgl_forward.5} parent=0 // pred_check
    _
  $region7: #{ishgl_forward.5} parent=0 // pred_check_branch
    %17 = sbr.rel (0) target = $region9
  $region8: #{ishgl_forward.5} parent=0 // pred_region
    _
  $region9: #{ishgl_forward.5} parent=0 // pred_fallthru
    _
  // Predicated region
  $region10: #{ishgl_forward.5} parent=0 // pred_check
    _
  $region11: #{ishgl_forward.5} parent=0 // pred_check_branch
    %19 = sbr.rel (0) target = $region13
  $region12: #{ishgl_forward.5} parent=0 // pred_region
    _
  $region13: #{ishgl_forward.5} parent=0 // pred_fallthru
    _
  // Predicated region
  $region14: #{ishgl_forward.5} parent=0 // pred_check
    _
  $region15: #{ishgl_forward.5} parent=0 // pred_check_branch
    %21 = sbr.rel (0) target = $region17
  $region16: #{ishgl_forward.5} parent=0 // pred_region
    _
  $region17: #{ishgl_forward.5} parent=0 // pred_fallthru
    _
  // Predicated region
  $region18: #{ishgl_forward.5} parent=0 // pred_check
    _
  $region19: #{ishgl_forward.5} parent=0 // pred_check_branch
    %23 = sbr.rel (0) target = $region21
  $region20: #{ishgl_forward.5} parent=0 // pred_region
    _
  $region21: #{ishgl_forward.5} parent=0 // pred_fallthru
    _
  // Predicated region
  $region22: #{ishgl_forward.5} parent=0 // pred_check
    _
  $region23: #{ishgl_forward.5} parent=0 // pred_check_branch
    %25 = sbr.rel (0) target = $region25
  $region24: #{ishgl_forward.5} parent=0 // pred_region
    _
  $region25: #{ishgl_forward.5} parent=0 // pred_fallthru
    _
  // Predicated region
  $region26: #{ishgl_forward.5} parent=0 // pred_check
    _
  $region27: #{ishgl_forward.5} parent=0 // pred_check_branch
    %27 = sbr.rel (0) target = $region29
  $region28: #{ishgl_forward.5} parent=0 // pred_region
    _
  $region29: #{ishgl_forward.5} parent=0 // pred_fallthru
    _
  // Predicated region
  $region30: #{ishgl_forward.5} parent=0 // pred_check
    _
  $region31: #{ishgl_forward.5} parent=0 // pred_check_branch
    %29 = sbr.rel (0) target = $region33
  $region32: #{ishgl_forward.5} parent=0 // pred_region
    _
  $region33: #{ishgl_forward.5} parent=0 // pred_fallthru
    _
  // Predicated region
  $region34: #{ishgl_forward.5} parent=0 // pred_check
    _
  $region35: #{ishgl_forward.5} parent=0 // pred_check_branch
    %31 = sbr.rel (0) target = $region37
  $region36: #{ishgl_forward.5} parent=0 // pred_region
    _
  $region37: #{ishgl_forward.5} parent=0 // pred_fallthru
    _
  %v32 = vld [vmem:[%s0] sm:$0xf]
  %v33 = vld [vmem:[%s0 + $0x4] sm:$0xf]
  %v34 = vld [vmem:[%s0 + $0x8] sm:$0xf]
  %v35 = vld [vmem:[%s0 + $0xc] sm:$0xf]
  %v36 = vld [vmem:[%s0 + $0x10] sm:$0xf]
  %v37 = vld [vmem:[%s0 + $0x14] sm:$0xf]
  %v38 = vld [vmem:[%s0 + $0x18] sm:$0xf]
  %v39 = vld [vmem:[%s0 + $0x1c] sm:$0xf]
  %v40 = vunpack.c.l.bf16 %v32
  %v41 = vunpack.c.l.bf16 %v33
  %v42 = vunpack.c.l.bf16 %v34
  %v43 = vunpack.c.l.bf16 %v35
  %v44 = vunpack.c.l.bf16 %v36
  %v45 = vunpack.c.l.bf16 %v37
  %v46 = vunpack.c.l.bf16 %v38
  %v47 = vunpack.c.l.bf16 %v39
  %v48 = vld [vmem:[%s1] sm:$0xff]
  %v49 = vld [vmem:[%s2] sm:$0xff]
  %v50 = vrcp.pop %v49
  %v51 = vrot.slane %v40, 4
  %v52 = vadd.f32 %v40, %v51
  %v53 = vrot.slane %v52, 2
  %v54 = vadd.f32 %v52, %v53
  %v55 = vrot.slane %v54, 1
  %v56 = vadd.f32 %v54, %v55
  %v57 = vrot.slane %v41, 4
  %v58 = vadd.f32 %v41, %v57
  %v59 = vrot.slane %v58, 2
  %v60 = vadd.f32 %v58, %v59
  %v61 = vrot.slane %v60, 1
  %v62 = vadd.f32 %v60, %v61
  %v63 = vrot.slane %v42, 4
  %v64 = vadd.f32 %v42, %v63
  %v65 = vrot.slane %v64, 2
  %v66 = vadd.f32 %v64, %v65
  %v67 = vrot.slane %v66, 1
  %v68 = vadd.f32 %v66, %v67
  %v69 = vrot.slane %v43, 4
  %v70 = vadd.f32 %v43, %v69
  %v71 = vrot.slane %v70, 2
  %v72 = vadd.f32 %v70, %v71
  %v73 = vrot.slane %v72, 1
  %v74 = vadd.f32 %v72, %v73
  %v75 = vrot.slane %v44, 4
  %v76 = vadd.f32 %v44, %v75
  %v77 = vrot.slane %v76, 2
  %v78 = vadd.f32 %v76, %v77
  %v79 = vrot.slane %v78, 1
  %v80 = vadd.f32 %v78, %v79
  %v81 = vrot.slane %v45, 4
  %v82 = vadd.f32 %v45, %v81
  %v83 = vrot.slane %v82, 2
  %v84 = vadd.f32 %v82, %v83
  %v85 = vrot.slane %v84, 1
  %v86 = vadd.f32 %v84, %v85
  %v87 = vrot.slane %v46, 4
  %v88 = vadd.f32 %v46, %v87
  %v89 = vrot.slane %v88, 2
  %v90 = vadd.f32 %v88, %v89
  %v91 = vrot.slane %v90, 1
  %v92 = vadd.f32 %v90, %v91
  %v93 = vrot.slane %v47, 4
  %v94 = vadd.f32 %v47, %v93
  %v95 = vrot.slane %v94, 2
  %v96 = vadd.f32 %v94, %v95
  %v97 = vrot.slane %v96, 1
  %v98 = vadd.f32 %v96, %v97
  %100 = vset.pattern.permute.xlu0 0
  %101 = vperm.xlu0 %100, %v50
  %v102 = vpop.permute.xlu0 %101
  %v103 = vrot.slane %v102, 1
  %v104 = vrot.slane %v102, 2
  %v105 = vrot.slane %v102, 3
  %v106 = vrot.slane %v102, 4
  %v107 = vrot.slane %v102, 5
  %v108 = vrot.slane %v102, 6
  %v109 = vrot.slane %v102, 7
  %v118 = vmul.f32 %v56, %v102
  %v119 = vmul.f32 %v62, %v103
  %v120 = vmul.f32 %v68, %v104
  %v121 = vmul.f32 %v74, %v105
  %v122 = vmul.f32 %v80, %v106
  %v123 = vmul.f32 %v86, %v107
  %v124 = vmul.f32 %v92, %v108
  %v125 = vmul.f32 %v98, %v109
  %v126 = vpack.c.bf16 %v41, %v40
  %v127 = vpack.c.bf16 %v43, %v42
  %v128 = vpack.c.bf16 %v45, %v44
  %v129 = vpack.c.bf16 %v47, %v46
  %v130 = vld [vmem:[%s4] sm:$0xf]
  %v131 = vld [vmem:[%s4 + $0x4] sm:$0xf]
  %v132 = vld [vmem:[%s4 + $0x8] sm:$0xf]
  %v133 = vld [vmem:[%s4 + $0xc] sm:$0xf]
  %v134 = vld [vmem:[%s4 + $0x10] sm:$0xf]
  %v135 = vld [vmem:[%s4 + $0x14] sm:$0xf]
  %v136 = vld [vmem:[%s4 + $0x18] sm:$0xf]
  %v137 = vld [vmem:[%s4 + $0x1c] sm:$0xf]
  %v138 = vld [vmem:[%s4 + $0x20] sm:$0xf]
  %v139 = vld [vmem:[%s4 + $0x24] sm:$0xf]
  %v140 = vld [vmem:[%s4 + $0x28] sm:$0xf]
  %v141 = vld [vmem:[%s4 + $0x2c] sm:$0xf]
  %v142 = vld [vmem:[%s4 + $0x30] sm:$0xf]
  %v143 = vld [vmem:[%s4 + $0x34] sm:$0xf]
  %v144 = vld [vmem:[%s4 + $0x38] sm:$0xf]
  %v145 = vld [vmem:[%s4 + $0x3c] sm:$0xf]
  %v162 = vunpack.c.l.b16 %v130
  %v163 = vunpack.c.l.b16 %v131
  %v164 = vunpack.c.l.b16 %v132
  %v165 = vunpack.c.l.b16 %v133
  %v166 = vunpack.c.l.b16 %v134
  %v167 = vunpack.c.l.b16 %v135
  %v168 = vunpack.c.l.b16 %v136
  %v169 = vunpack.c.l.b16 %v137
  %v170 = vunpack.c.l.b16 %v138
  %v171 = vunpack.c.l.b16 %v139
  %v172 = vunpack.c.l.b16 %v140
  %v173 = vunpack.c.l.b16 %v141
  %v174 = vunpack.c.l.b16 %v142
  %v175 = vunpack.c.l.b16 %v143
  %v176 = vunpack.c.l.b16 %v144
  %v177 = vunpack.c.l.b16 %v145
  %v178 = vpack.c.b16 %v163, %v162
  %v179 = vpack.c.b16 %v165, %v164
  %v180 = vpack.c.b16 %v167, %v166
  %v181 = vpack.c.b16 %v169, %v168
  %v182 = vpack.c.b16 %v171, %v170
  %v183 = vpack.c.b16 %v173, %v172
  %v184 = vpack.c.b16 %v175, %v174
  %v185 = vpack.c.b16 %v177, %v176
  %194 = vmatpush.bf16.msra.mxu0 %v185
  %195 = vmatpush.bf16.msra.mxu0 %v184
  %196 = vmatpush.bf16.msra.mxu0 %v183
  %197 = vmatpush.bf16.msra.mxu0 %v182
  %198 = vmatpush.bf16.msra.mxu0 %v181
  %199 = vmatpush.bf16.msra.mxu0 %v180
  %200 = vmatpush.bf16.msra.mxu0 %v179
  %201 = vmatpush.bf16.msra.mxu0 %v178
  %202 = vmatmul.bf16.gmra.mxu0 %v126
  %v203 = vpop.f32.mrf.mxu0
  %v204 = vadd.f32 0.0, %v203
  %v205 = vpop.f32.mrf.mxu0
  %v206 = vadd.f32 0.0, %v205
  %207 = vmatmul.bf16.gmra.mxu0 %v127
  %v208 = vpop.f32.mrf.mxu0
  %v209 = vadd.f32 0.0, %v208
  %v210 = vpop.f32.mrf.mxu0
  %v211 = vadd.f32 0.0, %v210
  %212 = vmatmul.bf16.gmra.mxu0 %v128
  %v213 = vpop.f32.mrf.mxu0
  %v214 = vadd.f32 0.0, %v213
  %v215 = vpop.f32.mrf.mxu0
  %v216 = vadd.f32 0.0, %v215
  %217 = vmatmul.bf16.gmra.mxu0 %v129
  %v218 = vpop.f32.mrf.mxu0
  %v219 = vadd.f32 0.0, %v218
  %v220 = vpop.f32.mrf.mxu0
  %v221 = vadd.f32 0.0, %v220
  %222 = vdwg.mxu0
  %v223 = vld [vmem:[%s3] sm:$0xff]
  %v224 = vadd.f32 %v204, %v223
  %v225 = vadd.f32 %v206, %v223
  %v226 = vadd.f32 %v209, %v223
  %v227 = vadd.f32 %v211, %v223
  %v228 = vadd.f32 %v214, %v223
  %v229 = vadd.f32 %v216, %v223
  %v230 = vadd.f32 %v219, %v223
  %v231 = vadd.f32 %v221, %v223
  %v232 = vtanh.pop %v224
  %v233 = vtanh.pop %v225
  %v234 = vtanh.pop %v226
  %v235 = vtanh.pop %v227
  %v236 = vtanh.pop %v228
  %v237 = vtanh.pop %v229
  %v238 = vtanh.pop %v230
  %v239 = vtanh.pop %v231
  %v240 = vpack.c.bf16 %v233, %v232
  %v241 = vpack.c.bf16 %v235, %v234
  %v242 = vpack.c.bf16 %v237, %v236
  %v243 = vpack.c.bf16 %v239, %v238
  %v244 = vld [vmem:[%s5] sm:$0xf]
  %v245 = vld [vmem:[%s5 + $0x4] sm:$0xf]
  %v246 = vld [vmem:[%s5 + $0x8] sm:$0xf]
  %v247 = vld [vmem:[%s5 + $0xc] sm:$0xf]
  %v248 = vld [vmem:[%s5 + $0x10] sm:$0xf]
  %v249 = vld [vmem:[%s5 + $0x14] sm:$0xf]
  %v250 = vld [vmem:[%s5 + $0x18] sm:$0xf]
  %v251 = vld [vmem:[%s5 + $0x1c] sm:$0xf]
  %v252 = vld [vmem:[%s5 + $0x20] sm:$0xf]
  %v253 = vld [vmem:[%s5 + $0x24] sm:$0xf]
  %v254 = vld [vmem:[%s5 + $0x28] sm:$0xf]
  %v255 = vld [vmem:[%s5 + $0x2c] sm:$0xf]
  %v256 = vld [vmem:[%s5 + $0x30] sm:$0xf]
  %v257 = vld [vmem:[%s5 + $0x34] sm:$0xf]
  %v258 = vld [vmem:[%s5 + $0x38] sm:$0xf]
  %v259 = vld [vmem:[%s5 + $0x3c] sm:$0xf]
  %v276 = vunpack.c.l.b16 %v244
  %v277 = vunpack.c.l.b16 %v245
  %v278 = vunpack.c.l.b16 %v246
  %v279 = vunpack.c.l.b16 %v247
  %v280 = vunpack.c.l.b16 %v248
  %v281 = vunpack.c.l.b16 %v249
  %v282 = vunpack.c.l.b16 %v250
  %v283 = vunpack.c.l.b16 %v251
  %v284 = vunpack.c.l.b16 %v252
  %v285 = vunpack.c.l.b16 %v253
  %v286 = vunpack.c.l.b16 %v254
  %v287 = vunpack.c.l.b16 %v255
  %v288 = vunpack.c.l.b16 %v256
  %v289 = vunpack.c.l.b16 %v257
  %v290 = vunpack.c.l.b16 %v258
  %v291 = vunpack.c.l.b16 %v259
  %v292 = vpack.c.b16 %v277, %v276
  %v293 = vpack.c.b16 %v279, %v278
  %v294 = vpack.c.b16 %v281, %v280
  %v295 = vpack.c.b16 %v283, %v282
  %v296 = vpack.c.b16 %v285, %v284
  %v297 = vpack.c.b16 %v287, %v286
  %v298 = vpack.c.b16 %v289, %v288
  %v299 = vpack.c.b16 %v291, %v290
  %308 = vmatpush.bf16.msra.mxu0 %v299
  %309 = vmatpush.bf16.msra.mxu0 %v298
  %310 = vmatpush.bf16.msra.mxu0 %v297
  %311 = vmatpush.bf16.msra.mxu0 %v296
  %312 = vmatpush.bf16.msra.mxu0 %v295
  %313 = vmatpush.bf16.msra.mxu0 %v294
  %314 = vmatpush.bf16.msra.mxu0 %v293
  %315 = vmatpush.bf16.msra.mxu0 %v292
  %316 = vmatmul.bf16.gmra.mxu0 %v240
  %v317 = vpop.f32.mrf.mxu0
  %v318 = vadd.f32 0.0, %v317
  %v319 = vpop.f32.mrf.mxu0
  %v320 = vadd.f32 0.0, %v319
  %321 = vmatmul.bf16.gmra.mxu0 %v241
  %v322 = vpop.f32.mrf.mxu0
  %v323 = vadd.f32 0.0, %v322
  %v324 = vpop.f32.mrf.mxu0
  %v325 = vadd.f32 0.0, %v324
  %326 = vmatmul.bf16.gmra.mxu0 %v242
  %v327 = vpop.f32.mrf.mxu0
  %v328 = vadd.f32 0.0, %v327
  %v329 = vpop.f32.mrf.mxu0
  %v330 = vadd.f32 0.0, %v329
  %331 = vmatmul.bf16.gmra.mxu0 %v243
  %v332 = vpop.f32.mrf.mxu0
  %v333 = vadd.f32 0.0, %v332
  %v334 = vpop.f32.mrf.mxu0
  %v335 = vadd.f32 0.0, %v334
  %336 = vdwg.mxu0
  %v337 = vpack.c.bf16 %v118, %v118
  %v338 = vpack.c.bf16 %v119, %v119
  %v339 = vpack.c.bf16 %v120, %v120
  %v340 = vpack.c.bf16 %v121, %v121
  %v341 = vpack.c.bf16 %v122, %v122
  %v342 = vpack.c.bf16 %v123, %v123
  %v343 = vpack.c.bf16 %v124, %v124
  %v344 = vpack.c.bf16 %v125, %v125
  %v345 = vld [vmem:[%s7] sm:$0xf]
  %v346 = vld [vmem:[%s7 + $0x4] sm:$0xf]
  %v347 = vld [vmem:[%s7 + $0x8] sm:$0xf]
  %v348 = vld [vmem:[%s7 + $0xc] sm:$0xf]
  %v349 = vld [vmem:[%s7 + $0x10] sm:$0xf]
  %v350 = vld [vmem:[%s7 + $0x14] sm:$0xf]
  %v351 = vld [vmem:[%s7 + $0x18] sm:$0xf]
  %v352 = vld [vmem:[%s7 + $0x1c] sm:$0xf]
  %v353 = vld [vmem:[%s7 + $0x20] sm:$0xf]
  %v354 = vld [vmem:[%s7 + $0x24] sm:$0xf]
  %v355 = vld [vmem:[%s7 + $0x28] sm:$0xf]
  %v356 = vld [vmem:[%s7 + $0x2c] sm:$0xf]
  %v357 = vld [vmem:[%s7 + $0x30] sm:$0xf]
  %v358 = vld [vmem:[%s7 + $0x34] sm:$0xf]
  %v359 = vld [vmem:[%s7 + $0x38] sm:$0xf]
  %v360 = vld [vmem:[%s7 + $0x3c] sm:$0xf]
  %v369 = vunpack.c.l.b16 %v337
  %v370 = vunpack.c.l.b16 %v338
  %v371 = vunpack.c.l.b16 %v339
  %v372 = vunpack.c.l.b16 %v340
  %v373 = vunpack.c.l.b16 %v341
  %v374 = vunpack.c.l.b16 %v342
  %v375 = vunpack.c.l.b16 %v343
  %v376 = vunpack.c.l.b16 %v344
  %v377 = vrot.slane %v370, 7
  %vm378 = vcmask 1041409
  %v379 = vsel %vm378, %v377, %v369
  %v380 = vrot.slane %v371, 6
  %vm381 = vcmask 1042434
  %v382 = vsel %vm381, %v380, %v379
  %v383 = vrot.slane %v372, 5
  %vm384 = vcmask 1043459
  %v385 = vsel %vm384, %v383, %v382
  %v386 = vrot.slane %v373, 4
  %vm387 = vcmask 1044484
  %v388 = vsel %vm387, %v386, %v385
  %v389 = vrot.slane %v374, 3
  %vm390 = vcmask 1045509
  %v391 = vsel %vm390, %v389, %v388
  %v392 = vrot.slane %v375, 2
  %vm393 = vcmask 1046534
  %v394 = vsel %vm393, %v392, %v391
  %v395 = vrot.slane %v376, 1
  %vm396 = vcmask 1047559
  %v397 = vsel %vm396, %v395, %v394
  %v398 = vpack.c.b16 %v397, %v397
  %v416 = vunpack.c.l.b16 %v345
  %v417 = vunpack.c.l.b16 %v346
  %v418 = vunpack.c.l.b16 %v347
  %v419 = vunpack.c.l.b16 %v348
  %v420 = vunpack.c.l.b16 %v349
  %v421 = vunpack.c.l.b16 %v350
  %v422 = vunpack.c.l.b16 %v351
  %v423 = vunpack.c.l.b16 %v352
  %v424 = vunpack.c.l.b16 %v353
  %v425 = vunpack.c.l.b16 %v354
  %v426 = vunpack.c.l.b16 %v355
  %v427 = vunpack.c.l.b16 %v356
  %v428 = vunpack.c.l.b16 %v357
  %v429 = vunpack.c.l.b16 %v358
  %v430 = vunpack.c.l.b16 %v359
  %v431 = vunpack.c.l.b16 %v360
  %v432 = vpack.c.b16 %v417, %v416
  %v433 = vpack.c.b16 %v419, %v418
  %v434 = vpack.c.b16 %v421, %v420
  %v435 = vpack.c.b16 %v423, %v422
  %v436 = vpack.c.b16 %v425, %v424
  %v437 = vpack.c.b16 %v427, %v426
  %v438 = vpack.c.b16 %v429, %v428
  %v439 = vpack.c.b16 %v431, %v430
  %448 = vmatpush.bf16.msra.mxu0 %v439
  %449 = vmatpush.bf16.msra.mxu0 %v438
  %450 = vmatpush.bf16.msra.mxu0 %v437
  %451 = vmatpush.bf16.msra.mxu0 %v436
  %452 = vmatpush.bf16.msra.mxu0 %v435
  %453 = vmatpush.bf16.msra.mxu0 %v434
  %454 = vmatpush.bf16.msra.mxu0 %v433
  %455 = vmatpush.bf16.msra.mxu0 %v432
  %456 = vmatmul.bf16.gmra.mxu0 %v398
  %v457 = vpop.f32.mrf.mxu0
  %v458 = vadd.f32 0.0, %v457
  %v459 = vpop.f32.mrf.mxu0
  %460 = vdwg.mxu0
  %v461 = vld [vmem:[%s6] sm:$0x1]
  %v463 = vperm.slane %v461, 0
  %v465 = vadd.f32 %v318, %v463
  %v466 = vadd.f32 %v320, %v463
  %v467 = vadd.f32 %v323, %v463
  %v468 = vadd.f32 %v325, %v463
  %v469 = vadd.f32 %v328, %v463
  %v470 = vadd.f32 %v330, %v463
  %v471 = vadd.f32 %v333, %v463
  %v472 = vadd.f32 %v335, %v463
  %v474 = vrot.slane %v458, 1
  %v475 = vrot.slane %v458, 2
  %v476 = vrot.slane %v458, 3
  %v477 = vrot.slane %v458, 4
  %v478 = vrot.slane %v458, 5
  %v479 = vrot.slane %v458, 6
  %v480 = vrot.slane %v458, 7
  %v481 = vperm.slane %v458, 0
  %v482 = vperm.slane %v474, 0
  %v483 = vperm.slane %v475, 0
  %v484 = vperm.slane %v476, 0
  %v485 = vperm.slane %v477, 0
  %v486 = vperm.slane %v478, 0
  %v487 = vperm.slane %v479, 0
  %v488 = vperm.slane %v480, 0
  %v497 = vadd.f32 %v465, %v481
  %v498 = vadd.f32 %v466, %v482
  %v499 = vadd.f32 %v467, %v483
  %v500 = vadd.f32 %v468, %v484
  %v501 = vadd.f32 %v469, %v485
  %v502 = vadd.f32 %v470, %v486
  %v503 = vadd.f32 %v471, %v487
  %v504 = vadd.f32 %v472, %v488
  %v505 = vxor.u32 %v497, 2147483648
  %v506 = vxor.u32 %v498, 2147483648
  %v507 = vxor.u32 %v499, 2147483648
  %v508 = vxor.u32 %v500, 2147483648
  %v509 = vxor.u32 %v501, 2147483648
  %v510 = vxor.u32 %v502, 2147483648
  %v511 = vxor.u32 %v503, 2147483648
  %v512 = vxor.u32 %v504, 2147483648
  %v513 = vmul.f32 %v505, 1.442695
  %v514 = vpow.pop %v513
  %v515 = vmul.f32 %v506, 1.442695
  %v516 = vpow.pop %v515
  %v517 = vmul.f32 %v507, 1.442695
  %v518 = vpow.pop %v517
  %v519 = vmul.f32 %v508, 1.442695
  %v520 = vpow.pop %v519
  %v521 = vmul.f32 %v509, 1.442695
  %v522 = vpow.pop %v521
  %v523 = vmul.f32 %v510, 1.442695
  %v524 = vpow.pop %v523
  %v525 = vmul.f32 %v511, 1.442695
  %v526 = vpow.pop %v525
  %v527 = vmul.f32 %v512, 1.442695
  %v528 = vpow.pop %v527
  %v529 = vadd.f32 %v514, 1.0
  %v530 = vadd.f32 %v516, 1.0
  %v531 = vadd.f32 %v518, 1.0
  %v532 = vadd.f32 %v520, 1.0
  %v533 = vadd.f32 %v522, 1.0
  %v534 = vadd.f32 %v524, 1.0
  %v535 = vadd.f32 %v526, 1.0
  %v536 = vadd.f32 %v528, 1.0
  %v537 = vrcp.pop %v529
  %v538 = vmul.f32 %v529, %v537
  %v539 = vsub.f32 1.0, %v538
  %v540 = vmul.f32 %v537, %v539
  %v541 = vadd.f32 %v537, %v540
  %vm542 = vweird.f32 %v529
  %vm543 = vweird.f32 %v537
  %vm544 = vmor %vm542, %vm543
  %v545 = vsel %vm544, %v537, %v541
  %v546 = vand.u32 2147483647, %v529
  %vm547 = vcmp.eq.f32.partialorder %v546, 8.507059e+37
  %v548 = vand.u32 %v529, 2147483648
  %v549 = vor.u32 1.1754944e-38, %v548
  %v550 = vsel %vm547, %v549, %v545
  %v551 = vmul.f32 1.0, %v550
  %v552 = vrcp.pop %v530
  %v553 = vmul.f32 %v530, %v552
  %v554 = vsub.f32 1.0, %v553
  %v555 = vmul.f32 %v552, %v554
  %v556 = vadd.f32 %v552, %v555
  %vm557 = vweird.f32 %v530
  %vm558 = vweird.f32 %v552
  %vm559 = vmor %vm557, %vm558
  %v560 = vsel %vm559, %v552, %v556
  %v561 = vand.u32 2147483647, %v530
  %vm562 = vcmp.eq.f32.partialorder %v561, 8.507059e+37
  %v563 = vand.u32 %v530, 2147483648
  %v564 = vor.u32 1.1754944e-38, %v563
  %v565 = vsel %vm562, %v564, %v560
  %v566 = vmul.f32 1.0, %v565
  %v567 = vrcp.pop %v531
  %v568 = vmul.f32 %v531, %v567
  %v569 = vsub.f32 1.0, %v568
  %v570 = vmul.f32 %v567, %v569
  %v571 = vadd.f32 %v567, %v570
  %vm572 = vweird.f32 %v531
  %vm573 = vweird.f32 %v567
  %vm574 = vmor %vm572, %vm573
  %v575 = vsel %vm574, %v567, %v571
  %v576 = vand.u32 2147483647, %v531
  %vm577 = vcmp.eq.f32.partialorder %v576, 8.507059e+37
  %v578 = vand.u32 %v531, 2147483648
  %v579 = vor.u32 1.1754944e-38, %v578
  %v580 = vsel %vm577, %v579, %v575
  %v581 = vmul.f32 1.0, %v580
  %v582 = vrcp.pop %v532
  %v583 = vmul.f32 %v532, %v582
  %v584 = vsub.f32 1.0, %v583
  %v585 = vmul.f32 %v582, %v584
  %v586 = vadd.f32 %v582, %v585
  %vm587 = vweird.f32 %v532
  %vm588 = vweird.f32 %v582
  %vm589 = vmor %vm587, %vm588
  %v590 = vsel %vm589, %v582, %v586
  %v591 = vand.u32 2147483647, %v532
  %vm592 = vcmp.eq.f32.partialorder %v591, 8.507059e+37
  %v593 = vand.u32 %v532, 2147483648
  %v594 = vor.u32 1.1754944e-38, %v593
  %v595 = vsel %vm592, %v594, %v590
  %v596 = vmul.f32 1.0, %v595
  %v597 = vrcp.pop %v533
  %v598 = vmul.f32 %v533, %v597
  %v599 = vsub.f32 1.0, %v598
  %v600 = vmul.f32 %v597, %v599
  %v601 = vadd.f32 %v597, %v600
  %vm602 = vweird.f32 %v533
  %vm603 = vweird.f32 %v597
  %vm604 = vmor %vm602, %vm603
  %v605 = vsel %vm604, %v597, %v601
  %v606 = vand.u32 2147483647, %v533
  %vm607 = vcmp.eq.f32.partialorder %v606, 8.507059e+37
  %v608 = vand.u32 %v533, 2147483648
  %v609 = vor.u32 1.1754944e-38, %v608
  %v610 = vsel %vm607, %v609, %v605
  %v611 = vmul.f32 1.0, %v610
  %v612 = vrcp.pop %v534
  %v613 = vmul.f32 %v534, %v612
  %v614 = vsub.f32 1.0, %v613
  %v615 = vmul.f32 %v612, %v614
  %v616 = vadd.f32 %v612, %v615
  %vm617 = vweird.f32 %v534
  %vm618 = vweird.f32 %v612
  %vm619 = vmor %vm617, %vm618
  %v620 = vsel %vm619, %v612, %v616
  %v621 = vand.u32 2147483647, %v534
  %vm622 = vcmp.eq.f32.partialorder %v621, 8.507059e+37
  %v623 = vand.u32 %v534, 2147483648
  %v624 = vor.u32 1.1754944e-38, %v623
  %v625 = vsel %vm622, %v624, %v620
  %v626 = vmul.f32 1.0, %v625
  %v627 = vrcp.pop %v535
  %v628 = vmul.f32 %v535, %v627
  %v629 = vsub.f32 1.0, %v628
  %v630 = vmul.f32 %v627, %v629
  %v631 = vadd.f32 %v627, %v630
  %vm632 = vweird.f32 %v535
  %vm633 = vweird.f32 %v627
  %vm634 = vmor %vm632, %vm633
  %v635 = vsel %vm634, %v627, %v631
  %v636 = vand.u32 2147483647, %v535
  %vm637 = vcmp.eq.f32.partialorder %v636, 8.507059e+37
  %v638 = vand.u32 %v535, 2147483648
  %v639 = vor.u32 1.1754944e-38, %v638
  %v640 = vsel %vm637, %v639, %v635
  %v641 = vmul.f32 1.0, %v640
  %v642 = vrcp.pop %v536
  %v643 = vmul.f32 %v536, %v642
  %v644 = vsub.f32 1.0, %v643
  %v645 = vmul.f32 %v642, %v644
  %v646 = vadd.f32 %v642, %v645
  %vm647 = vweird.f32 %v536
  %vm648 = vweird.f32 %v642
  %vm649 = vmor %vm647, %vm648
  %v650 = vsel %vm649, %v642, %v646
  %v651 = vand.u32 2147483647, %v536
  %vm652 = vcmp.eq.f32.partialorder %v651, 8.507059e+37
  %v653 = vand.u32 %v536, 2147483648
  %v654 = vor.u32 1.1754944e-38, %v653
  %v655 = vsel %vm652, %v654, %v650
  %v656 = vmul.f32 1.0, %v655
  %v657 = vld [vmem:[%s8] sm:$0x1]
  %v659 = vperm.slane %v657, 0
  %v661 = vmul.f32 %v551, %v659
  %v662 = vmul.f32 %v566, %v659
  %v663 = vmul.f32 %v581, %v659
  %v664 = vmul.f32 %v596, %v659
  %v665 = vmul.f32 %v611, %v659
  %v666 = vmul.f32 %v626, %v659
  %v667 = vmul.f32 %v641, %v659
  %v668 = vmul.f32 %v656, %v659
  %669 = vadd.xlane.f32.xlu0 %v661
  %v670 = vpop.xlane.xlu0 %669
  %671 = vadd.xlane.f32.xlu0 %v662
  %v672 = vpop.xlane.xlu0 %671
  %673 = vadd.xlane.f32.xlu0 %v663
  %v674 = vpop.xlane.xlu0 %673
  %675 = vadd.xlane.f32.xlu0 %v664
  %v676 = vpop.xlane.xlu0 %675
  %677 = vadd.xlane.f32.xlu0 %v665
  %v678 = vpop.xlane.xlu0 %677
  %679 = vadd.xlane.f32.xlu0 %v666
  %v680 = vpop.xlane.xlu0 %679
  %681 = vadd.xlane.f32.xlu0 %v667
  %v682 = vpop.xlane.xlu0 %681
  %683 = vadd.xlane.f32.xlu0 %v668
  %v684 = vpop.xlane.xlu0 %683
  %v685 = vperm.slane %v48, 0
  %v686 = vlaneseq
  %v687 = vshrl.u32 %v686, 7
  %689 = vset.pattern.permute.xlu0 %v687
  %690 = vperm.xlu0 %689, %v685
  %v691 = vpop.permute.xlu0 %690
  %v692 = vperm.slane %v48, 1
  %v693 = vlaneseq
  %v694 = vshrl.u32 %v693, 7
  %696 = vset.pattern.permute.xlu0 %v694
  %697 = vperm.xlu0 %696, %v692
  %v698 = vpop.permute.xlu0 %697
  %v699 = vperm.slane %v48, 2
  %v700 = vlaneseq
  %v701 = vshrl.u32 %v700, 7
  %703 = vset.pattern.permute.xlu0 %v701
  %704 = vperm.xlu0 %703, %v699
  %v705 = vpop.permute.xlu0 %704
  %v706 = vperm.slane %v48, 3
  %v707 = vlaneseq
  %v708 = vshrl.u32 %v707, 7
  %710 = vset.pattern.permute.xlu0 %v708
  %711 = vperm.xlu0 %710, %v706
  %v712 = vpop.permute.xlu0 %711
  %v713 = vperm.slane %v48, 4
  %v714 = vlaneseq
  %v715 = vshrl.u32 %v714, 7
  %717 = vset.pattern.permute.xlu0 %v715
  %718 = vperm.xlu0 %717, %v713
  %v719 = vpop.permute.xlu0 %718
  %v720 = vperm.slane %v48, 5
  %v721 = vlaneseq
  %v722 = vshrl.u32 %v721, 7
  %724 = vset.pattern.permute.xlu0 %v722
  %725 = vperm.xlu0 %724, %v720
  %v726 = vpop.permute.xlu0 %725
  %v727 = vperm.slane %v48, 6
  %v728 = vlaneseq
  %v729 = vshrl.u32 %v728, 7
  %731 = vset.pattern.permute.xlu0 %v729
  %732 = vperm.xlu0 %731, %v727
  %v733 = vpop.permute.xlu0 %732
  %v734 = vperm.slane %v48, 7
  %v735 = vlaneseq
  %v736 = vshrl.u32 %v735, 7
  %738 = vset.pattern.permute.xlu0 %v736
  %739 = vperm.xlu0 %738, %v734
  %v740 = vpop.permute.xlu0 %739
  %v741 = vmul.f32 %v670, %v691
  %v742 = vmul.f32 %v672, %v698
  %v743 = vmul.f32 %v674, %v705
  %v744 = vmul.f32 %v676, %v712
  %v745 = vmul.f32 %v678, %v719
  %v746 = vmul.f32 %v680, %v726
  %v747 = vmul.f32 %v682, %v733
  %v748 = vmul.f32 %v684, %v740
  %v749 = vmul.f32 %v741, %v40
  %v750 = vmul.f32 %v742, %v41
  %v751 = vmul.f32 %v743, %v42
  %v752 = vmul.f32 %v744, %v43
  %v753 = vmul.f32 %v745, %v44
  %v754 = vmul.f32 %v746, %v45
  %v755 = vmul.f32 %v747, %v46
  %v756 = vmul.f32 %v748, %v47
  %v757 = vrot.slane %v749, 4
  %v758 = vadd.f32 %v749, %v757
  %v759 = vrot.slane %v758, 2
  %v760 = vadd.f32 %v758, %v759
  %v761 = vrot.slane %v760, 1
  %v762 = vadd.f32 %v760, %v761
  %v763 = vrot.slane %v750, 4
  %v764 = vadd.f32 %v750, %v763
  %v765 = vrot.slane %v764, 2
  %v766 = vadd.f32 %v764, %v765
  %v767 = vrot.slane %v766, 1
  %v768 = vadd.f32 %v766, %v767
  %v769 = vrot.slane %v751, 4
  %v770 = vadd.f32 %v751, %v769
  %v771 = vrot.slane %v770, 2
  %v772 = vadd.f32 %v770, %v771
  %v773 = vrot.slane %v772, 1
  %v774 = vadd.f32 %v772, %v773
  %v775 = vrot.slane %v752, 4
  %v776 = vadd.f32 %v752, %v775
  %v777 = vrot.slane %v776, 2
  %v778 = vadd.f32 %v776, %v777
  %v779 = vrot.slane %v778, 1
  %v780 = vadd.f32 %v778, %v779
  %v781 = vrot.slane %v753, 4
  %v782 = vadd.f32 %v753, %v781
  %v783 = vrot.slane %v782, 2
  %v784 = vadd.f32 %v782, %v783
  %v785 = vrot.slane %v784, 1
  %v786 = vadd.f32 %v784, %v785
  %v787 = vrot.slane %v754, 4
  %v788 = vadd.f32 %v754, %v787
  %v789 = vrot.slane %v788, 2
  %v790 = vadd.f32 %v788, %v789
  %v791 = vrot.slane %v790, 1
  %v792 = vadd.f32 %v790, %v791
  %v793 = vrot.slane %v755, 4
  %v794 = vadd.f32 %v755, %v793
  %v795 = vrot.slane %v794, 2
  %v796 = vadd.f32 %v794, %v795
  %v797 = vrot.slane %v796, 1
  %v798 = vadd.f32 %v796, %v797
  %v799 = vrot.slane %v756, 4
  %v800 = vadd.f32 %v756, %v799
  %v801 = vrot.slane %v800, 2
  %v802 = vadd.f32 %v800, %v801
  %v803 = vrot.slane %v802, 1
  %v804 = vadd.f32 %v802, %v803
  %v813 = vsel %vm378, %v768, %v762
  %v814 = vsel %vm381, %v774, %v813
  %v815 = vsel %vm384, %v780, %v814
  %v816 = vsel %vm387, %v786, %v815
  %v817 = vsel %vm390, %v792, %v816
  %v818 = vsel %vm393, %v798, %v817
  %v819 = vsel %vm396, %v804, %v818
  %821 = vst [vmem:[%s9] sm:$0xff] %v819
  // Predicated region
  $region38: #{ishgl_forward.5} parent=0 // pred_check
    _
  $region39: #{ishgl_forward.5} parent=0 // pred_check_branch
    %823 = sbr.rel (0) target = $region41
  $region40: #{ishgl_forward.5} parent=0 // pred_region
    _
  $region41: #{ishgl_forward.5} parent=0 // pred_fallthru
    _
  // Predicated region
  $region42: #{ishgl_forward.5} parent=0 // pred_check
    _
  $region43: #{ishgl_forward.5} parent=0 // pred_check_branch
    %825 = sbr.rel (0) target = $region45
  $region44: #{ishgl_forward.5} parent=0 // pred_region
    _
  $region45: #{ishgl_forward.5} parent=0 // pred_fallthru
    _

</llo_original>
